<compile_context>
chip_gen: v7x
topology: tpu7x:2x2x1
jax: 0.10.0
libtpu: 0.0.40
codegen_flags: <defaults>
</compile_context>

<pallas_src>
import functools

import jax
import jax.numpy as jnp
from jax import lax
from jax.experimental import pallas as pl
from jax.experimental.pallas import tpu as pltpu


def _focal_loss_kernel(logits_ref, targets_ref, out_ref, *,
                       alpha, gamma, n, tn, tiles_per_row):
    row = pl.program_id(0)          # "parallel" axis (one per TensorCore on v7x)
    i = pl.program_id(1)            # "arbitrary" reduction axis
    tile = row * tiles_per_row + i  # logical tile id (may overflow; masked below)

    x = logits_ref[...].astype(jnp.float32)      # (C, TN)  classes on sublanes
    t = targets_ref[...].astype(jnp.int32)       # (1, TN)  widened from int8

    # --- softmax over the class (sublane) axis ---
    m = jnp.max(x, axis=0, keepdims=True)                     # (1, TN)
    e = jnp.exp(x - m)                                        # (C, TN)
    sumexp = jnp.sum(e, axis=0, keepdims=True)                # (1, TN)
    class_ids = lax.broadcasted_iota(jnp.int32, x.shape, 0)   # (C, TN)
    onehot = class_ids == t
    e_t = jnp.sum(jnp.where(onehot, e, 0.0), axis=0, keepdims=True)

    # pt <= 1 by construction (e_t is one summand of sumexp); the tiny floor
    # only matters if the target logit is ~88 below the max (f32 underflow)
    # and keeps ce finite there instead of producing inf.
    pt = jnp.maximum(e_t, 1e-37) / sumexp
    ce = -jnp.log(pt)                                         # >= 0
    u = 1.0 - pt                                              # >= 0
    if gamma == 2.0:
        focal = u * u                                         # VPU mul, no EUP pow
    else:
        focal = jnp.exp(gamma * jnp.log(jnp.maximum(u, 1e-30)))

    # --- false-positive reweighting: argmax != 0  <=>  x[0] strictly < max
    # (preserves torch first-occurrence tie semantics, no extra reduction) ---
    pred_nonzero = x[0:1, :] < m
    fp_mask = pred_nonzero & (t == 0)

    # --- fold FP 2x reweighting and the padding mask into the summand ---
    col = tile * tn + lax.broadcasted_iota(jnp.int32, (1, tn), 1)
    valid = col < n
    w = jnp.where(fp_mask, 2.0 * alpha, alpha)
    summand = jnp.where(valid, w * focal * ce, 0.0)   # select kills NaN pad data
    partial = jnp.sum(summand, axis=1, keepdims=True)          # (1, 1)

    # --- resident per-row accumulator across the "arbitrary" tile axis ---
    @pl.when(i == 0)
    def _():
        out_ref[...] = jnp.zeros_like(out_ref)

    out_ref[...] += partial


def weighted_focal_loss_cn(logits_cn, targets, alpha=0.25, gamma=2.0,
                           block_n=65536):
    """Class-major entry point: logits_cn is (C, N), targets is (N,) int.

    Returns the scalar mean weighted focal loss (float32)."""
    c, n = logits_cn.shape

    # Targets as int8 when they fit: ~20% HBM traffic for C=8 bf16 logits.
    if c <= 127:
        targets_t = targets.astype(jnp.int8).reshape(1, n)
    else:
        targets_t = targets.astype(jnp.int32).reshape(1, n)

    # Tile size: ~8 live (C, TN) f32 temporaries per step; cap them at ~16 MiB
    # so the kernel fits v7x's scoped VMEM (64 MiB physical) with headroom,
    # while being large enough to amortize the ~0.35us per-grid-step overhead.
    vmem_budget = 16 << 20
    max_tn = max(128, (vmem_budget // (8 * c * 4)) // 128 * 128)
    tn_cap = max(128, min(int(block_n), max_tn) // 128 * 128)
    if n <= tn_cap:
        tn = n                      # single block == full array dim (always legal)
    else:
        tn = tn_cap                 # multiple of 128; last block is partial

    num_tiles = pl.cdiv(n, tn)
    rows = 2 if num_tiles >= 2 else 1          # use both TensorCores on v7x
    tiles_per_row = pl.cdiv(num_tiles, rows)
    last_tile = num_tiles - 1

    def _in_map(r, i):
        # Clamp so an overflow tile (rows*tiles_per_row > num_tiles) re-reads
        # the last real tile instead of issuing an out-of-bounds DMA; its
        # columns are zeroed inside the kernel via the logical column index.
        return (0, jnp.minimum(r * tiles_per_row + i, last_tile))

    kernel = functools.partial(
        _focal_loss_kernel,
        alpha=float(alpha), gamma=float(gamma),
        n=n, tn=tn, tiles_per_row=tiles_per_row,
    )
    out = pl.pallas_call(
        kernel,
        out_shape=jax.ShapeDtypeStruct((rows, 1), jnp.float32),
        grid=(rows, tiles_per_row),
        in_specs=[
            pl.BlockSpec((c, tn), _in_map),    # logits (C, N) tiles
            pl.BlockSpec((1, tn), _in_map),    # targets (1, N) tiles
        ],
        out_specs=pl.BlockSpec((1, 1), lambda r, i: (r, 0)),  # per-row accumulator
        compiler_params=pltpu.CompilerParams(
            dimension_semantics=("parallel", "arbitrary"),
            vmem_limit_bytes=48 * 1024 * 1024,
        ),
    )(logits_cn, targets_t)

    # Sum the per-row partials and normalize exactly once.
    return jnp.sum(out) / n


def weighted_focal_loss(logits, targets, alpha=0.25, gamma=2.0, block_n=65536):
    """Module-compatible interface: logits (N, C), targets (N,) -> scalar f32.

    TODO(synk): the .T below is a full HBM relayout of logits; producers that
    can emit class-major (C, N) logits should call weighted_focal_loss_cn
    directly (or fuse the transpose into the final projection) to avoid it.
    """
    return weighted_focal_loss_cn(logits.T, targets, alpha=alpha, gamma=gamma,
                                  block_n=block_n)


def _reference(logits, targets, alpha=0.25, gamma=2.0):
    """Pure-JAX reference replicating the PyTorch forward."""
    logz = jax.nn.log_softmax(logits.astype(jnp.float32), axis=1)
    ce = -jnp.take_along_axis(logz, targets[:, None].astype(jnp.int32), axis=1)[:, 0]
    pt = jnp.exp(-ce)
    loss = alpha * (1.0 - pt) ** gamma * ce
    pred = jnp.argmax(logits, axis=1)
    fp = (pred != 0) & (targets == 0)
    loss = jnp.where(fp, loss * 2.0, loss)
    return jnp.mean(loss)


if __name__ == "__main__":
    key = jax.random.PRNGKey(0)
    k_logits, k_targets, k_logits2, k_targets2 = jax.random.split(key, 4)

    # Small shape consistent with the module (batch of logits over 8 classes).
    N, NUM_CLASSES = 16, 8
    logits = jax.random.normal(k_logits, (N, NUM_CLASSES), dtype=jnp.float32)
    targets = jax.random.randint(k_targets, (N,), 0, NUM_CLASSES, dtype=jnp.int32)

    out = weighted_focal_loss(logits, targets, alpha=0.25, gamma=2.0)
    out = jax.block_until_ready(out)
    ref = jax.block_until_ready(_reference(logits, targets))
    assert jnp.allclose(out, ref, rtol=1e-5, atol=1e-6), (out, ref)

    # Extra check exercising the multi-tile path: partial last block, masked
    # overflow tile, int8 targets and the two-row resident accumulators.
    N2, C2 = 300, 8
    logits2 = jax.random.normal(k_logits2, (N2, C2), dtype=jnp.float32)
    targets2 = jax.random.randint(k_targets2, (N2,), 0, C2, dtype=jnp.int32)
    out2 = jax.block_until_ready(
        weighted_focal_loss(logits2, targets2, alpha=0.25, gamma=2.0, block_n=128))
    ref2 = jax.block_until_ready(_reference(logits2, targets2))
    assert jnp.allclose(out2, ref2, rtol=2e-5, atol=1e-6), (out2, ref2)

    print("KERNEL_OK")
</pallas_src>

<mosaic_0001>
module attributes {stable_mosaic.version = 11 : i64} {
  func.func @_focal_loss_kernel(%arg0: i32, %arg1: i32, %arg2: memref<8x16xf32, #tpu.memory_space<vmem>>, %arg3: memref<1x16xi8, #tpu.memory_space<vmem>>, %arg4: memref<1x1xf32, #tpu.memory_space<vmem>>) attributes {dimension_semantics = [#tpu.dimension_semantics<parallel>, #tpu.dimension_semantics<arbitrary>], iteration_bounds = array<i64: 1, 1>, scalar_prefetch = 0 : i64, scratch_operands = 0 : i64, tpu.core_type = #tpu.core_type<tc>, window_params = [{transform_indices = @transform_0, window_bounds = array<i64: 8, 16>}, {transform_indices = @transform_1, window_bounds = array<i64: 1, 16>}, {transform_indices = @transform_2, window_bounds = array<i64: 1, 1>}]} {
    %c1_i32 = arith.constant 1 : i32
    %0 = arith.muli %arg0, %c1_i32 : i32
    %1 = arith.addi %0, %arg1 : i32
    %c0 = arith.constant 0 : index
    %c0_0 = arith.constant 0 : index
    %2 = vector.load %arg2[%c0, %c0_0] : memref<8x16xf32, #tpu.memory_space<vmem>>, vector<8x16xf32>
    %c0_1 = arith.constant 0 : index
    %c0_2 = arith.constant 0 : index
    %3 = vector.load %arg3[%c0_1, %c0_2] : memref<1x16xi8, #tpu.memory_space<vmem>>, vector<1x16xi8>
    %4 = arith.extsi %3 : vector<1x16xi8> to vector<1x16xi32>
    %cst = arith.constant dense<0xFF800000> : vector<16xf32>
    %5 = vector.multi_reduction <maximumf>, %2, %cst [0] : vector<8x16xf32> to vector<16xf32>
    %6 = vector.shape_cast %5 : vector<16xf32> to vector<1x16xf32>
    %7 = vector.broadcast %6 : vector<1x16xf32> to vector<8x16xf32>
    %8 = arith.subf %2, %7 : vector<8x16xf32>
    %9 = math.exp %8 : vector<8x16xf32>
    %cst_3 = arith.constant dense<0.000000e+00> : vector<16xf32>
    %10 = vector.multi_reduction <add>, %9, %cst_3 [0] : vector<8x16xf32> to vector<16xf32>
    %11 = vector.shape_cast %10 : vector<16xf32> to vector<1x16xf32>
    %12 = tpu.iota {dimensions = array<i32: 0>} : vector<8x16xi32>
    %13 = vector.broadcast %4 : vector<1x16xi32> to vector<8x16xi32>
    %14 = arith.cmpi eq, %12, %13 : vector<8x16xi32>
    %cst_4 = arith.constant 0.000000e+00 : f32
    %15 = vector.broadcast %cst_4 : f32 to vector<8x16xf32>
    %16 = arith.select %14, %9, %15 : vector<8x16xi1>, vector<8x16xf32>
    %cst_5 = arith.constant dense<0.000000e+00> : vector<16xf32>
    %17 = vector.multi_reduction <add>, %16, %cst_5 [0] : vector<8x16xf32> to vector<16xf32>
    %18 = vector.shape_cast %17 : vector<16xf32> to vector<1x16xf32>
    %cst_6 = arith.constant 9.99999991E-38 : f32
    %19 = vector.broadcast %cst_6 : f32 to vector<1x16xf32>
    %20 = arith.maximumf %18, %19 : vector<1x16xf32>
    %21 = arith.divf %20, %11 : vector<1x16xf32>
    %22 = math.log %21 : vector<1x16xf32>
    %cst_7 = arith.constant 0.000000e+00 : f32
    %23 = vector.broadcast %cst_7 : f32 to vector<1x16xf32>
    %24 = arith.subf %23, %22 : vector<1x16xf32>
    %cst_8 = arith.constant 1.000000e+00 : f32
    %25 = vector.broadcast %cst_8 : f32 to vector<1x16xf32>
    %26 = arith.subf %25, %21 : vector<1x16xf32>
    %27 = arith.mulf %26, %26 : vector<1x16xf32>
    %28 = vector.extract_strided_slice %2 {offsets = [0, 0], sizes = [1, 16], strides = [1, 1]} : vector<8x16xf32> to vector<1x16xf32>
    %29 = arith.cmpf olt, %28, %6 : vector<1x16xf32>
    %c0_i32 = arith.constant 0 : i32
    %30 = vector.broadcast %c0_i32 : i32 to vector<1x16xi32>
    %31 = arith.cmpi eq, %4, %30 : vector<1x16xi32>
    %32 = arith.andi %29, %31 : vector<1x16xi1>
    %c16_i32 = arith.constant 16 : i32
    %33 = arith.muli %1, %c16_i32 : i32
    %34 = tpu.iota {dimensions = array<i32: 1>} : vector<1x16xi32>
    %35 = vector.broadcast %33 : i32 to vector<1x16xi32>
    %36 = arith.addi %35, %34 : vector<1x16xi32>
    %c16_i32_9 = arith.constant 16 : i32
    %37 = vector.broadcast %c16_i32_9 : i32 to vector<1x16xi32>
    %38 = arith.cmpi slt, %36, %37 : vector<1x16xi32>
    %cst_10 = arith.constant 5.000000e-01 : f32
    %cst_11 = arith.constant 2.500000e-01 : f32
    %39 = vector.broadcast %cst_10 : f32 to vector<1x16xf32>
    %40 = vector.broadcast %cst_11 : f32 to vector<1x16xf32>
    %41 = arith.select %32, %39, %40 : vector<1x16xi1>, vector<1x16xf32>
    %42 = arith.mulf %41, %27 : vector<1x16xf32>
    %43 = arith.mulf %42, %24 : vector<1x16xf32>
    %cst_12 = arith.constant 0.000000e+00 : f32
    %44 = vector.broadcast %cst_12 : f32 to vector<1x16xf32>
    %45 = arith.select %38, %43, %44 : vector<1x16xi1>, vector<1x16xf32>
    %cst_13 = arith.constant dense<0.000000e+00> : vector<1xf32>
    %46 = vector.multi_reduction <add>, %45, %cst_13 [1] : vector<1x16xf32> to vector<1xf32>
    %47 = vector.shape_cast %46 : vector<1xf32> to vector<1x1xf32>
    %c0_i32_14 = arith.constant 0 : i32
    %48 = arith.cmpi eq, %arg1, %c0_i32_14 : i32
    %49 = arith.extui %48 : i1 to i32
    %c0_i32_15 = arith.constant 0 : i32
    %50 = arith.cmpi ne, %49, %c0_i32_15 : i32
    scf.if %50 {
      %cst_20 = arith.constant 0.000000e+00 : f32
      %54 = vector.broadcast %cst_20 : f32 to vector<1x1xf32>
      %c0_21 = arith.constant 0 : index
      %c0_22 = arith.constant 0 : index
      %55 = vector.load %arg4[%c0_21, %c0_22] : memref<1x1xf32, #tpu.memory_space<vmem>>, vector<1x1xf32>
      tpu.vector_store %arg4[%c0_21, %c0_22], %54 {strides = array<i32>} : memref<1x1xf32, #tpu.memory_space<vmem>>, vector<1x1xf32>,
    } else {
    }
    %c0_16 = arith.constant 0 : index
    %c0_17 = arith.constant 0 : index
    %51 = vector.load %arg4[%c0_16, %c0_17] : memref<1x1xf32, #tpu.memory_space<vmem>>, vector<1x1xf32>
    %52 = arith.addf %51, %47 : vector<1x1xf32>
    %c0_18 = arith.constant 0 : index
    %c0_19 = arith.constant 0 : index
    %53 = vector.load %arg4[%c0_18, %c0_19] : memref<1x1xf32, #tpu.memory_space<vmem>>, vector<1x1xf32>
    tpu.vector_store %arg4[%c0_18, %c0_19], %52 {strides = array<i32>} : memref<1x1xf32, #tpu.memory_space<vmem>>, vector<1x1xf32>,
    return
  }
  func.func @transform_0(%arg0: i32, %arg1: i32) -> (i32, i32) {
    %c1_i32 = arith.constant 1 : i32
    %0 = arith.muli %arg0, %c1_i32 : i32
    %1 = arith.addi %0, %arg1 : i32
    %c0_i32 = arith.constant 0 : i32
    %2 = arith.minsi %1, %c0_i32 : i32
    %c0_i32_0 = arith.constant 0 : i32
    %c0_i32_1 = arith.constant 0 : i32
    return %c0_i32_0, %2 : i32, i32
  }
  func.func @transform_1(%arg0: i32, %arg1: i32) -> (i32, i32) {
    %c1_i32 = arith.constant 1 : i32
    %0 = arith.muli %arg0, %c1_i32 : i32
    %1 = arith.addi %0, %arg1 : i32
    %c0_i32 = arith.constant 0 : i32
    %2 = arith.minsi %1, %c0_i32 : i32
    %c0_i32_0 = arith.constant 0 : i32
    %c0_i32_1 = arith.constant 0 : i32
    return %c0_i32_0, %2 : i32, i32
  }
  func.func @transform_2(%arg0: i32, %arg1: i32) -> (i32, i32) {
    %c0_i32 = arith.constant 0 : i32
    %c0_i32_0 = arith.constant 0 : i32
    return %arg0, %c0_i32 : i32, i32
  }
}

</mosaic_0001>

<llo_original>
// kernel: tpu_custom_call.1
$region0: #{tpu_custom_call.1}
  #allocation0 [shape = 'u32[]', space=smem, size = 0x4, offset = 0x4, fixed_abs, tag = 'smem constant byte address 0x4 - core index']
  #allocation1 [shape = 'u32[144,128]{1,0:T(1,128)}', space=vmem, size = 0x12000, scoped, tag = 'internal scratch']
  %s0 = inlined_call_operand.hbm [shape: f32[8,16], index: 0, kind: input, shape index: {}]
  %s1 = inlined_call_operand.vmem [shape: s8[1,16], index: 1, kind: input, shape index: {}]
  %s2 = inlined_call_operand.hbm [shape: f32[1,1], index: 2, kind: output, shape index: {}]
  %s3 = sld [smem:[#allocation0]]
  $region26: #{tpu_custom_call.1} parent=0
    _
  %s5 = ssub.s32 1, %s3
  %s6 = scalar_select 0, %s5, %s3
  $region1: #{tpu_custom_call.1} parent=0
    #allocation2 [shape = 'u8[4096]{0}', space=vmem, size = 0x1000, scoped, tag = 'input window, operand 0, single buffered']
    #allocation3 [shape = 's32[1]{0}', space=sflag, size = 0x4, scoped, tag = 'scoped memory for tpu_custom_call.1']
    #allocation4 [shape = 's32[1]{0}', space=sflag, size = 0x4, scoped, tag = 'scoped memory for tpu_custom_call.1']
    #allocation5 [shape = 'u8[512]{0}', space=vmem, size = 0x400, scoped, tag = 'output window, operand 0, single buffered']
    %7 = vsyncpa [#allocation3], 0
    %8 = vsyncpa [#allocation4], 0
    // Predicated region
    $region2: #{tpu_custom_call.1} parent=1 // pred_check
      _
    $region3: #{tpu_custom_call.1} parent=1 // pred_check_branch
      %10 = sbr.rel (0) target = $region5
    $region4: #{tpu_custom_call.1} parent=1 // pred_region
      %s11 = sadd.s32 0, 0
      %p12 = scmp.lt.s32.totalorder %s11, 0
      %s13 = scalar_select %p12, %s11, 0
      %s15 = ssub.s32 128, 128
      %16 = vsyncadd [#allocation3], %s15
      %s17 = smul.addr %s13, 128
      %s18 = scalar_lea.hbm %s0, %s17
      %s20 = sshll.u32 [#allocation2], 4
      %s21 = int_to_ptr.vmem [resolvable:$true] %s20
      %23 = dma.hbm_to_vmem [thread:$0]  %s18, 128, %s21, [#allocation3]
    $region5: #{tpu_custom_call.1} parent=1 // pred_fallthru
      _
    // Predicated region
    $region6: #{tpu_custom_call.1} parent=1 // pred_check
      _
    $region7: #{tpu_custom_call.1} parent=1 // pred_check_branch
      %25 = sbr.rel (0) target = $region9
    $region8: #{tpu_custom_call.1} parent=1 // pred_region
      %s26 = sadd.s32 0, 0
      %p27 = scmp.lt.s32.totalorder %s26, 0
      %s28 = scalar_select %p27, %s26, 0
      %p29 = scmp.lt.s32.totalorder %s28, 0
      %s30 = scalar_select %p29, %s28, 0
      %s31 = scalar_lea.vmem %s1, %s30
      %s32 = sadd.s32 0, 0
      %p33 = scmp.lt.s32.totalorder %s32, 0
      %s34 = scalar_select %p33, %s32, 0
    $region9: #{tpu_custom_call.1} parent=1 // pred_fallthru
      _
    // Predicated region
    $region10: #{tpu_custom_call.1} parent=1 // pred_check
      _
    $region11: #{tpu_custom_call.1} parent=1 // pred_check_branch
      %36 = sbr.rel (0) target = $region13
    $region12: #{tpu_custom_call.1} parent=1 // pred_region
      %37 = dma.done [#allocation3], 128
    $region13: #{tpu_custom_call.1} parent=1 // pred_fallthru
      _
    %s38 = sadd.s32 0, 0
    %p39 = scmp.lt.s32.totalorder %s38, 0
    %s40 = scalar_select %p39, %s38, 0
    %p41 = scmp.lt.s32.totalorder %s40, 0
    %s42 = scalar_select %p41, %s40, 0
    %s43 = scalar_lea.vmem %s1, %s42
    %s44 = sadd.s32 0, 0
    %p45 = scmp.lt.s32.totalorder %s44, 0
    %s46 = scalar_select %p45, %s44, 0
    %s47 = sadd.s32 0, 0
    %p48 = scmp.lt.s32.totalorder %s47, 0
    %s49 = scalar_select %p48, %s47, 0
    %p50 = scmp.lt.s32.totalorder %s49, 0
    %s51 = scalar_select %p50, %s49, 0
    %s52 = scalar_lea.vmem %s1, %s51
    %s53 = sadd.s32 0, 0
    %p54 = scmp.lt.s32.totalorder %s53, 0
    %s55 = scalar_select %p54, %s53, 0
    %s56 = sadd.s32 0, 0
    %v57 = vld [vmem:[#allocation2] sm:$0xff]
    %v58 = vld [vmem:[%s52] sm:$0x1]
    %v59 = vunpack.c.0.s8 %v58
    %vm60 = vcmask 130048
    %v61 = vsel %vm60, %v57, -inf
    %v62 = vrot.slane %v61, 4
    %v63 = vmax.f32 %v61, %v62
    %v64 = vrot.slane %v63, 2
    %v65 = vmax.f32 %v63, %v64
    %v66 = vrot.slane %v65, 1
    %v67 = vmax.f32 %v65, %v66
    %v68 = vsub.f32 %v57, %v67
    %v69 = vmul.f32 %v68, 1.442695
    %v70 = vpow.pop %v69
    %v71 = vsel %vm60, %v70, 0.0
    %v72 = vrot.slane %v71, 4
    %v73 = vadd.f32 %v71, %v72
    %v74 = vrot.slane %v73, 2
    %v75 = vadd.f32 %v73, %v74
    %v76 = vrot.slane %v75, 1
    %v77 = vadd.f32 %v75, %v76
    %v78 = vlaneseq
    %v79 = vshrl.u32 %v78, 7
    %v80 = vlaneseq
    %v81 = vshrl.u32 %v80, 7
    %v82 = vsub.s32 0, %v81
    %v83 = vrot.slane %v59, %v82
    %vm84 = vcmp.eq.s32.totalorder %v79, %v83
    %v85 = vsel %vm84, %v70, 0.0
    %v86 = vsel %vm60, %v85, 0.0
    %v87 = vrot.slane %v86, 4
    %v88 = vadd.f32 %v86, %v87
    %v89 = vrot.slane %v88, 2
    %v90 = vadd.f32 %v88, %v89
    %v91 = vrot.slane %v90, 1
    %v92 = vadd.f32 %v90, %v91
    %v93 = vmax.f32 %v92, 1e-37
    %v94 = vrcp.pop %v77
    %v95 = vmul.f32 %v93, %v94
    %v96 = vlog2.pop %v95
    %v97 = vmul.f32 %v96, 0.6931472
    %v98 = vsub.f32 0.0, %v97
    %v99 = vsub.f32 1.0, %v95
    %v100 = vmul.f32 %v99, %v99
    %vm101 = vcmp.lt.f32.partialorder %v57, %v67
    %vm102 = vcmp.eq.s32.totalorder %v59, 0
    %vm103 = vmand %vm101, %vm102
    %s104 = smul.u32 %s56, 16
    %v105 = vlaneseq
    %v106 = vand.u32 %v105, 127
    %v107 = vstv %s104
    %v108 = vadd.s32 %v107, %v106
    %vm109 = vcmp.lt.s32.totalorder %v108, 16
    %v110 = vsel %vm103, 0.5, 0.25
    %v111 = vmul.f32 %v110, %v100
    %v112 = vmul.f32 %v111, %v98
    %v113 = vsel %vm109, %v112, 0.0
    %vm114 = vcmask 122880
    %v115 = vsel %vm114, %v113, 0.0
    %116 = vadd.xlane.f32.xlu0 %v115
    %v117 = vpop.xlane.xlu0 %116
    %p118 = scmp.eq.s32.totalorder 0, 0
    // Predicated region
    $region14: #{tpu_custom_call.1} parent=1 // pred_check
      %p119 = pneg %p118
    $region15: #{tpu_custom_call.1} parent=1 // pred_check_branch
      %121 = sbr.rel (%p119) target = $region17
    $region16: #{tpu_custom_call.1} parent=1 // pred_region
      %vm122 = vcmask 0
      %123 = vst.msk [vmem:[#allocation5] sm:$0x1] %vm122, 0.0
    $region17: #{tpu_custom_call.1} parent=1 // pred_fallthru
      _
    %v124 = vld [vmem:[#allocation5] sm:$0x1]
    %v125 = vadd.f32 %v124, %v117
    %vm126 = vcmask 0
    %127 = vst.msk [vmem:[#allocation5] sm:$0x1] %vm126, %v125
    // Predicated region
    $region18: #{tpu_custom_call.1} parent=1 // pred_check
      _
    $region19: #{tpu_custom_call.1} parent=1 // pred_check_branch
      %129 = sbr.rel (0) target = $region21
    $region20: #{tpu_custom_call.1} parent=1 // pred_region
      %s131 = ssub.s32 16, 16
      %132 = vsyncadd [#allocation4], %s131
      %s134 = sshll.u32 [#allocation5], 4
      %s135 = int_to_ptr.vmem [resolvable:$true] %s134
      %137 = dma.vmem_to_hbm [thread:$0]  %s135, 16, %s2, [#allocation4]
    $region21: #{tpu_custom_call.1} parent=1 // pred_fallthru
      _
    // Predicated region
    $region22: #{tpu_custom_call.1} parent=1 // pred_check
      _
    $region23: #{tpu_custom_call.1} parent=1 // pred_check_branch
      %139 = sbr.rel (0) target = $region25
    $region24: #{tpu_custom_call.1} parent=1 // pred_region
      %140 = dma.done [#allocation4], 16
    $region25: #{tpu_custom_call.1} parent=1 // pred_fallthru
      _
    %141 = vsyncpa [#allocation3], 1
    %142 = vsyncpa [#allocation4], 1

</llo_original>
